<compile_context>
chip_gen: v7x
topology: tpu7x:2x2x1
jax: 0.10.0
libtpu: 0.0.40
codegen_flags: <defaults>
</compile_context>

<pallas_src>
import numpy as np
import jax
import jax.numpy as jnp
from jax.experimental import pallas as pl
from jax.experimental.pallas import tpu as pltpu

# ----------------------------- config (module defaults) -----------------------------
ACTION_ENCODING_DIM = 2
NUM_CHANNELS = 64                                        # = in_dim of fc_dynamics
LATENT_DIM = NUM_CHANNELS - ACTION_ENCODING_DIM          # 62
REWARD_HIDDEN = 32                                       # reward_head_hidden_channels=[32]
OUTPUT_SUPPORT_SIZE = 601
BN_EPS = 1e-5
BATCH = 8

LANE = 128


def _round_up(n, m):
    return ((n + m - 1) // m) * m


IN_PAD = _round_up(NUM_CHANNELS, LANE)                   # 128 (x padded to full lanes)
LATENT_PAD = _round_up(LATENT_DIM, LANE)                 # 128
HIDDEN_PAD = _round_up(REWARD_HIDDEN, LANE)              # 128
SUPPORT_PAD = _round_up(OUTPUT_SUPPORT_SIZE, LANE)       # 640

# packed-weight row offsets (all multiples of 128 -> aligned for bf16 (16,128) tiling)
_W1_OFF = 0
_W2_OFF = _W1_OFF + IN_PAD                               # 128
_WR1_OFF = _W2_OFF + LATENT_PAD                          # 256
_WPACK_ROWS = _WR1_OFF + LATENT_PAD                      # 384


# ----------------------------- Pallas kernel ---------------------------------------
def dynamics_kernel(
    x_ref,        # (BM, 128)  bf16    state_action_encoding tile (lane-padded, pre-cast)
    wpack_ref,    # (384, 128) bf16    [w1(128x128); w2(128x128); wr1(128x128)] (BN folded, padded)
    bpack_ref,    # (3, 128)   f32     [b1; b2; br1]                            (BN folded, padded)
    wr2_ref,      # (128, 640) bf16    final reward linear                      (padded)
    br2_ref,      # (1, 640)   f32
    next_ref,     # (BM, 128)  f32     padded next_latent_state
    reward_ref,   # (BM, 640)  f32     padded reward logits
):
    # fc_dynamics layer 0: Linear (+ folded BN) -> ReLU
    w1 = wpack_ref[_W1_OFF:_W1_OFF + IN_PAD, :]
    h = jnp.maximum(
        jnp.dot(x_ref[...], w1, preferred_element_type=jnp.float32) + bpack_ref[0:1, :], 0.0)

    # fc_dynamics layer 1 (output_norm=True, output_activation=True)
    w2 = wpack_ref[_W2_OFF:_W2_OFF + LATENT_PAD, :]
    nls = jnp.maximum(
        jnp.dot(h.astype(jnp.bfloat16), w2, preferred_element_type=jnp.float32)
        + bpack_ref[1:2, :], 0.0)
    next_ref[...] = nls

    # fc_reward_head hidden: Linear (+ folded BN) -> ReLU
    wr1 = wpack_ref[_WR1_OFF:_WR1_OFF + LATENT_PAD, :]
    r = jnp.maximum(
        jnp.dot(nls.astype(jnp.bfloat16), wr1, preferred_element_type=jnp.float32)
        + bpack_ref[2:3, :], 0.0)

    # fc_reward_head output: Linear only (no norm, no activation)
    reward_ref[...] = (
        jnp.dot(r.astype(jnp.bfloat16), wr2_ref[...], preferred_element_type=jnp.float32)
        + br2_ref[...])


def _choose_batch_tile(B, batch_tile):
    """Pick the row tile. Force >=2 grid steps when possible so v7x's two TCs both engage."""
    b8 = _round_up(B, 8)
    if b8 <= 16:
        bm = b8                                   # too small to split usefully
    elif b8 <= batch_tile:
        bm = _round_up((b8 + 1) // 2, 8)          # 2-way split of a single-block batch
    else:
        bm = batch_tile
    b_pad = _round_up(b8, bm)
    return bm, b_pad


def dynamics_forward(x, kparams, *, batch_tile=512):
    """x: (B, NUM_CHANNELS) float32.

    Returns (next_latent_state (B, 62) f32, reward (B, 601) f32).
    """
    B = x.shape[0]
    bm, b_pad = _choose_batch_tile(B, batch_tile)
    grid = (b_pad // bm,)

    # pad rows to b_pad, lanes to 128, cast to bf16 (halves input DMA; MXU is bf16-native)
    x_in = jnp.pad(x, ((0, b_pad - B), (0, IN_PAD - NUM_CHANNELS))).astype(jnp.bfloat16)

    w_pack = kparams["w_pack"]   # bf16
    b_pack = kparams["b_pack"]   # f32
    wr2 = kparams["wr2"]         # bf16
    br2 = kparams["br2"]         # f32

    flops = 2 * b_pad * (IN_PAD * LATENT_PAD + LATENT_PAD * LATENT_PAD
                         + LATENT_PAD * HIDDEN_PAD + HIDDEN_PAD * SUPPORT_PAD)
    bytes_accessed = (2 * (x_in.size + w_pack.size + wr2.size)            # bf16 operands
                      + 4 * (b_pack.size + br2.size)                      # f32 biases
                      + 4 * (b_pad * LATENT_PAD + b_pad * SUPPORT_PAD))   # f32 outputs

    next_pad, reward_pad = pl.pallas_call(
        dynamics_kernel,
        grid=grid,
        in_specs=[
            pl.BlockSpec((bm, IN_PAD), lambda i: (i, 0)),
            pl.BlockSpec(w_pack.shape, lambda i: (0, 0)),   # weights stay resident
            pl.BlockSpec(b_pack.shape, lambda i: (0, 0)),
            pl.BlockSpec(wr2.shape, lambda i: (0, 0)),
            pl.BlockSpec(br2.shape, lambda i: (0, 0)),
        ],
        out_specs=(
            pl.BlockSpec((bm, LATENT_PAD), lambda i: (i, 0)),
            pl.BlockSpec((bm, SUPPORT_PAD), lambda i: (i, 0)),
        ),
        out_shape=(
            jax.ShapeDtypeStruct((b_pad, LATENT_PAD), jnp.float32),
            jax.ShapeDtypeStruct((b_pad, SUPPORT_PAD), jnp.float32),
        ),
        compiler_params=pltpu.CompilerParams(
            dimension_semantics=("parallel",),
            vmem_limit_bytes=32 * 1024 * 1024,   # cover bm=512 tiles under v5e's 16MiB default
        ),
        cost_estimate=pl.CostEstimate(
            flops=flops, transcendentals=0, bytes_accessed=bytes_accessed),
    )(x_in, w_pack, b_pack, wr2, br2)

    return (next_pad[:B, :LATENT_DIM], reward_pad[:B, :OUTPUT_SUPPORT_SIZE])


# ----------------------------- parameter setup --------------------------------------
def make_params(key, last_linear_layer_init_zero=True):
    """Raw (unfolded) parameters mirroring the PyTorch module (eval-mode BN stats)."""
    ks = jax.random.split(key, 24)

    def linear(kw, kb, fan_in, fan_out):
        bound = 1.0 / np.sqrt(fan_in)
        w = jax.random.uniform(kw, (fan_in, fan_out), jnp.float32, -bound, bound)
        b = jax.random.uniform(kb, (1, fan_out), jnp.float32, -bound, bound)
        return w, b

    def bn(kg, kb, km, kv, dim):
        gamma = 1.0 + 0.1 * jax.random.normal(kg, (dim,), jnp.float32)
        beta = 0.1 * jax.random.normal(kb, (dim,), jnp.float32)
        mean = 0.1 * jax.random.normal(km, (dim,), jnp.float32)
        var = jnp.abs(1.0 + 0.1 * jax.random.normal(kv, (dim,), jnp.float32))
        return (gamma, beta, mean, var)

    w1, b1 = linear(ks[0], ks[1], NUM_CHANNELS, LATENT_DIM)
    bn1 = bn(ks[2], ks[3], ks[4], ks[5], LATENT_DIM)
    w2, b2 = linear(ks[6], ks[7], LATENT_DIM, LATENT_DIM)
    bn2 = bn(ks[8], ks[9], ks[10], ks[11], LATENT_DIM)
    wr1, br1 = linear(ks[12], ks[13], LATENT_DIM, REWARD_HIDDEN)
    bnr = bn(ks[14], ks[15], ks[16], ks[17], REWARD_HIDDEN)

    if last_linear_layer_init_zero:
        wr2 = jnp.zeros((REWARD_HIDDEN, OUTPUT_SUPPORT_SIZE), jnp.float32)
        br2 = jnp.zeros((1, OUTPUT_SUPPORT_SIZE), jnp.float32)
    else:
        wr2, br2 = linear(ks[18], ks[19], REWARD_HIDDEN, OUTPUT_SUPPORT_SIZE)

    return dict(w1=w1, b1=b1, bn1=bn1, w2=w2, b2=b2, bn2=bn2,
                wr1=wr1, br1=br1, bnr=bnr, wr2=wr2, br2=br2)


def _fold_bn_into_linear(w, b, bn_params, eps=BN_EPS):
    """BN(x @ W + b) == x @ (W*scale) + (b*scale + shift)  in eval mode."""
    gamma, beta, mean, var = bn_params
    scale = gamma / jnp.sqrt(var + eps)
    shift = beta - mean * scale
    return w * scale[None, :], b * scale[None, :] + shift[None, :]


def _pad2(a, rows, cols):
    # NOTE: zero-padding is a correctness invariant (padded bias lanes must stay 0).
    return jnp.pad(a, ((0, rows - a.shape[0]), (0, cols - a.shape[1])))


def fold_and_pack(raw):
    """Fold BN into the linears, pad to 128-multiples, pack; weights stored as bf16."""
    w1f, b1f = _fold_bn_into_linear(raw["w1"], raw["b1"], raw["bn1"])
    w2f, b2f = _fold_bn_into_linear(raw["w2"], raw["b2"], raw["bn2"])
    wr1f, br1f = _fold_bn_into_linear(raw["wr1"], raw["br1"], raw["bnr"])

    w_pack = jnp.concatenate([
        _pad2(w1f, IN_PAD, LATENT_PAD),             # (128, 128) zero rows for padded x lanes
        _pad2(w2f, LATENT_PAD, LATENT_PAD),         # (128, 128)
        _pad2(wr1f, LATENT_PAD, HIDDEN_PAD),        # (128, 128)
    ], axis=0).astype(jnp.bfloat16)                 # (384, 128) bf16
    b_pack = jnp.concatenate([
        _pad2(b1f, 1, LATENT_PAD),
        _pad2(b2f, 1, LATENT_PAD),
        _pad2(br1f, 1, HIDDEN_PAD),
    ], axis=0)                                      # (3, 128) f32
    wr2p = _pad2(raw["wr2"], HIDDEN_PAD, SUPPORT_PAD).astype(jnp.bfloat16)  # (128, 640) bf16
    br2p = _pad2(raw["br2"], 1, SUPPORT_PAD)                                # (1, 640) f32

    return dict(w_pack=w_pack, b_pack=b_pack, wr2=wr2p, br2=br2p)


# ----------------------------- pure-JAX reference (unfolded BN, f32) -----------------
def reference_forward(x, raw):
    def bn(z, p):
        gamma, beta, mean, var = p
        return (z - mean) / jnp.sqrt(var + BN_EPS) * gamma + beta

    h = jnp.maximum(bn(x @ raw["w1"] + raw["b1"], raw["bn1"]), 0.0)
    nls = jnp.maximum(bn(h @ raw["w2"] + raw["b2"], raw["bn2"]), 0.0)
    r = jnp.maximum(bn(nls @ raw["wr1"] + raw["br1"], raw["bnr"]), 0.0)
    reward = r @ raw["wr2"] + raw["br2"]
    return nls, reward


if __name__ == "__main__":
    key = jax.random.PRNGKey(0)
    k_param, k_x = jax.random.split(key)

    # state_action_encoding: concat(latent_state, action_encoding) -> (B, num_channels)
    x = jax.random.normal(k_x, (BATCH, NUM_CHANNELS), jnp.float32)

    # bf16 matmul operands -> compare against f32 reference with loosened tolerance
    RTOL, ATOL = 3e-2, 3e-2

    # 1) spec-default parameters (last_linear_layer_init_zero=True)
    raw = make_params(k_param, last_linear_layer_init_zero=True)
    kp = fold_and_pack(raw)
    next_latent, reward = jax.block_until_ready(dynamics_forward(x, kp))
    ref_next, ref_reward = reference_forward(x, raw)

    assert next_latent.shape == (BATCH, LATENT_DIM)
    assert reward.shape == (BATCH, OUTPUT_SUPPORT_SIZE)
    np.testing.assert_allclose(np.asarray(next_latent), np.asarray(ref_next),
                               rtol=RTOL, atol=ATOL)
    np.testing.assert_allclose(np.asarray(reward), np.asarray(ref_reward),
                               rtol=RTOL, atol=ATOL)

    # 2) non-zero final layer, to numerically exercise the 32->601 reward matmul,
    #    with a batch large enough to hit the 2-block grid path
    B2 = 24
    x2 = jax.random.normal(jax.random.PRNGKey(1), (B2, NUM_CHANNELS), jnp.float32)
    raw_nz = make_params(k_param, last_linear_layer_init_zero=False)
    kp_nz = fold_and_pack(raw_nz)
    next_nz, reward_nz = jax.block_until_ready(dynamics_forward(x2, kp_nz))
    ref_next_nz, ref_reward_nz = reference_forward(x2, raw_nz)
    np.testing.assert_allclose(np.asarray(next_nz), np.asarray(ref_next_nz),
                               rtol=RTOL, atol=ATOL)
    np.testing.assert_allclose(np.asarray(reward_nz), np.asarray(ref_reward_nz),
                               rtol=RTOL, atol=ATOL)

    print("KERNEL_OK")
</pallas_src>

<mosaic_0001>
module attributes {stable_mosaic.version = 11 : i64} {
  func.func @dynamics_kernel(%arg0: i32, %arg1: memref<8x128xbf16, #tpu.memory_space<vmem>>, %arg2: memref<384x128xbf16, #tpu.memory_space<vmem>>, %arg3: memref<3x128xf32, #tpu.memory_space<vmem>>, %arg4: memref<128x640xbf16, #tpu.memory_space<vmem>>, %arg5: memref<1x640xf32, #tpu.memory_space<vmem>>, %arg6: memref<8x128xf32, #tpu.memory_space<vmem>>, %arg7: memref<8x640xf32, #tpu.memory_space<vmem>>) attributes {dimension_semantics = [#tpu.dimension_semantics<parallel>], iteration_bounds = array<i64: 1>, scalar_prefetch = 0 : i64, scratch_operands = 0 : i64, tpu.core_type = #tpu.core_type<tc>, window_params = [{transform_indices = @transform_0, window_bounds = array<i64: 8, 128>}, {pipeline_mode = #tpu.pipeline_mode<synchronous>, transform_indices = @transform_1, window_bounds = array<i64: 384, 128>}, {pipeline_mode = #tpu.pipeline_mode<synchronous>, transform_indices = @transform_2, window_bounds = array<i64: 3, 128>}, {pipeline_mode = #tpu.pipeline_mode<synchronous>, transform_indices = @transform_3, window_bounds = array<i64: 128, 640>}, {pipeline_mode = #tpu.pipeline_mode<synchronous>, transform_indices = @transform_4, window_bounds = array<i64: 1, 640>}, {transform_indices = @transform_5, window_bounds = array<i64: 8, 128>}, {transform_indices = @transform_6, window_bounds = array<i64: 8, 640>}]} {
    %c0 = arith.constant 0 : index
    %c0_0 = arith.constant 0 : index
    %0 = vector.load %arg2[%c0, %c0_0] : memref<384x128xbf16, #tpu.memory_space<vmem>>, vector<128x128xbf16>
    %c0_1 = arith.constant 0 : index
    %c0_2 = arith.constant 0 : index
    %1 = vector.load %arg1[%c0_1, %c0_2] : memref<8x128xbf16, #tpu.memory_space<vmem>>, vector<8x128xbf16>
    %cst = arith.constant dense<0.000000e+00> : vector<8x128xf32>
    %2 = tpu.matmul %1, %0, %cst {dimension_numbers = #tpu.dot_dimension_numbers<[1], [0], [0], [1], [0, 0, 1, 1], [], []>} : vector<8x128xbf16>, vector<128x128xbf16>, vector<8x128xf32> -> vector<8x128xf32>
    %c0_3 = arith.constant 0 : index
    %c0_4 = arith.constant 0 : index
    %3 = vector.load %arg3[%c0_3, %c0_4] : memref<3x128xf32, #tpu.memory_space<vmem>>, vector<1x128xf32>
    %4 = vector.broadcast %3 : vector<1x128xf32> to vector<8x128xf32>
    %5 = arith.addf %2, %4 : vector<8x128xf32>
    %cst_5 = arith.constant 0.000000e+00 : f32
    %6 = vector.broadcast %cst_5 : f32 to vector<8x128xf32>
    %7 = arith.maximumf %5, %6 : vector<8x128xf32>
    %c128 = arith.constant 128 : index
    %c0_6 = arith.constant 0 : index
    %8 = vector.load %arg2[%c128, %c0_6] : memref<384x128xbf16, #tpu.memory_space<vmem>>, vector<128x128xbf16>
    %9 = arith.truncf %7 : vector<8x128xf32> to vector<8x128xbf16>
    %cst_7 = arith.constant dense<0.000000e+00> : vector<8x128xf32>
    %10 = tpu.matmul %9, %8, %cst_7 {dimension_numbers = #tpu.dot_dimension_numbers<[1], [0], [0], [1], [0, 0, 1, 1], [], []>} : vector<8x128xbf16>, vector<128x128xbf16>, vector<8x128xf32> -> vector<8x128xf32>
    %c1 = arith.constant 1 : index
    %c0_8 = arith.constant 0 : index
    %11 = vector.load %arg3[%c1, %c0_8] : memref<3x128xf32, #tpu.memory_space<vmem>>, vector<1x128xf32>
    %12 = vector.broadcast %11 : vector<1x128xf32> to vector<8x128xf32>
    %13 = arith.addf %10, %12 : vector<8x128xf32>
    %cst_9 = arith.constant 0.000000e+00 : f32
    %14 = vector.broadcast %cst_9 : f32 to vector<8x128xf32>
    %15 = arith.maximumf %13, %14 : vector<8x128xf32>
    %c0_10 = arith.constant 0 : index
    %c0_11 = arith.constant 0 : index
    %16 = vector.load %arg6[%c0_10, %c0_11] : memref<8x128xf32, #tpu.memory_space<vmem>>, vector<8x128xf32>
    tpu.vector_store %arg6[%c0_10, %c0_11], %15 {strides = array<i32>} : memref<8x128xf32, #tpu.memory_space<vmem>>, vector<8x128xf32>,
    %c256 = arith.constant 256 : index
    %c0_12 = arith.constant 0 : index
    %17 = vector.load %arg2[%c256, %c0_12] : memref<384x128xbf16, #tpu.memory_space<vmem>>, vector<128x128xbf16>
    %18 = arith.truncf %15 : vector<8x128xf32> to vector<8x128xbf16>
    %cst_13 = arith.constant dense<0.000000e+00> : vector<8x128xf32>
    %19 = tpu.matmul %18, %17, %cst_13 {dimension_numbers = #tpu.dot_dimension_numbers<[1], [0], [0], [1], [0, 0, 1, 1], [], []>} : vector<8x128xbf16>, vector<128x128xbf16>, vector<8x128xf32> -> vector<8x128xf32>
    %c2 = arith.constant 2 : index
    %c0_14 = arith.constant 0 : index
    %20 = vector.load %arg3[%c2, %c0_14] : memref<3x128xf32, #tpu.memory_space<vmem>>, vector<1x128xf32>
    %21 = vector.broadcast %20 : vector<1x128xf32> to vector<8x128xf32>
    %22 = arith.addf %19, %21 : vector<8x128xf32>
    %cst_15 = arith.constant 0.000000e+00 : f32
    %23 = vector.broadcast %cst_15 : f32 to vector<8x128xf32>
    %24 = arith.maximumf %22, %23 : vector<8x128xf32>
    %25 = arith.truncf %24 : vector<8x128xf32> to vector<8x128xbf16>
    %c0_16 = arith.constant 0 : index
    %c0_17 = arith.constant 0 : index
    %26 = vector.load %arg4[%c0_16, %c0_17] : memref<128x640xbf16, #tpu.memory_space<vmem>>, vector<128x640xbf16>
    %cst_18 = arith.constant dense<0.000000e+00> : vector<8x640xf32>
    %27 = tpu.matmul %25, %26, %cst_18 {dimension_numbers = #tpu.dot_dimension_numbers<[1], [0], [0], [1], [0, 0, 1, 1], [], []>} : vector<8x128xbf16>, vector<128x640xbf16>, vector<8x640xf32> -> vector<8x640xf32>
    %c0_19 = arith.constant 0 : index
    %c0_20 = arith.constant 0 : index
    %28 = vector.load %arg5[%c0_19, %c0_20] : memref<1x640xf32, #tpu.memory_space<vmem>>, vector<1x640xf32>
    %29 = vector.broadcast %28 : vector<1x640xf32> to vector<8x640xf32>
    %30 = arith.addf %27, %29 : vector<8x640xf32>
    %c0_21 = arith.constant 0 : index
    %c0_22 = arith.constant 0 : index
    %31 = vector.load %arg7[%c0_21, %c0_22] : memref<8x640xf32, #tpu.memory_space<vmem>>, vector<8x640xf32>
    tpu.vector_store %arg7[%c0_21, %c0_22], %30 {strides = array<i32>} : memref<8x640xf32, #tpu.memory_space<vmem>>, vector<8x640xf32>,
    return
  }
  func.func @transform_0(%arg0: i32) -> (i32, i32) {
    %c0_i32 = arith.constant 0 : i32
    %c0_i32_0 = arith.constant 0 : i32
    return %arg0, %c0_i32 : i32, i32
  }
  func.func @transform_1(%arg0: i32) -> (i32, i32) {
    %c0_i32 = arith.constant 0 : i32
    %c0_i32_0 = arith.constant 0 : i32
    %c0_i32_1 = arith.constant 0 : i32
    return %c0_i32, %c0_i32_0 : i32, i32
  }
  func.func @transform_2(%arg0: i32) -> (i32, i32) {
    %c0_i32 = arith.constant 0 : i32
    %c0_i32_0 = arith.constant 0 : i32
    %c0_i32_1 = arith.constant 0 : i32
    return %c0_i32, %c0_i32_0 : i32, i32
  }
  func.func @transform_3(%arg0: i32) -> (i32, i32) {
    %c0_i32 = arith.constant 0 : i32
    %c0_i32_0 = arith.constant 0 : i32
    %c0_i32_1 = arith.constant 0 : i32
    return %c0_i32, %c0_i32_0 : i32, i32
  }
  func.func @transform_4(%arg0: i32) -> (i32, i32) {
    %c0_i32 = arith.constant 0 : i32
    %c0_i32_0 = arith.constant 0 : i32
    %c0_i32_1 = arith.constant 0 : i32
    return %c0_i32, %c0_i32_0 : i32, i32
  }
  func.func @transform_5(%arg0: i32) -> (i32, i32) {
    %c0_i32 = arith.constant 0 : i32
    %c0_i32_0 = arith.constant 0 : i32
    return %arg0, %c0_i32 : i32, i32
  }
  func.func @transform_6(%arg0: i32) -> (i32, i32) {
    %c0_i32 = arith.constant 0 : i32
    %c0_i32_0 = arith.constant 0 : i32
    return %arg0, %c0_i32 : i32, i32
  }
}

</mosaic_0001>

<llo_original>
// kernel: tpu_custom_call.1
$region0: #{tpu_custom_call.1}
  #allocation0 [shape = 'u32[]', space=smem, size = 0x4, offset = 0x4, fixed_abs, tag = 'smem constant byte address 0x4 - core index']
  #allocation1 [shape = 'u32[144,128]{1,0:T(1,128)}', space=vmem, size = 0x12000, scoped, tag = 'internal scratch']
  %s0 = inlined_call_operand.hbm [shape: bf16[8,128], index: 0, kind: input, shape index: {}]
  %s1 = inlined_call_operand.hbm [shape: bf16[384,128], index: 1, kind: input, shape index: {}]
  %s2 = inlined_call_operand.vmem [shape: f32[3,128], index: 2, kind: input, shape index: {}]
  %s3 = inlined_call_operand.hbm [shape: bf16[128,640], index: 3, kind: input, shape index: {}]
  %s4 = inlined_call_operand.vmem [shape: f32[1,640], index: 4, kind: input, shape index: {}]
  %s5 = inlined_call_operand.hbm [shape: f32[8,128], index: 5, kind: output, shape index: {0}]
  %s6 = inlined_call_operand.hbm [shape: f32[8,640], index: 6, kind: output, shape index: {1}]
  %7 = xla_tuple %s5, %s6
  %s8 = sld [smem:[#allocation0]]
  $region50: #{tpu_custom_call.1} parent=0
    _
  %s10 = ssub.s32 1, %s8
  %s11 = scalar_select 0, %s10, %s8
  $region1: #{tpu_custom_call.1} parent=0
    #allocation2 [shape = 'u8[2048]{0}', space=vmem, size = 0x800, scoped, tag = 'input window, operand 0, single buffered']
    #allocation3 [shape = 's32[1]{0}', space=sflag, size = 0x4, scoped, tag = 'scoped memory for tpu_custom_call.1']
    #allocation4 [shape = 's32[1]{0}', space=sflag, size = 0x4, scoped, tag = 'scoped memory for tpu_custom_call.1']
    #allocation5 [shape = 'u8[98304]{0}', space=vmem, size = 0x18000, scoped, tag = 'input window, operand 1, single buffered']
    #allocation6 [shape = 's32[1]{0}', space=sflag, size = 0x4, scoped, tag = 'scoped memory for tpu_custom_call.1']
    #allocation7 [shape = 'u8[163840]{0}', space=vmem, size = 0x28000, scoped, tag = 'input window, operand 3, single buffered']
    #allocation8 [shape = 'u8[4096]{0}', space=vmem, size = 0x1000, scoped, tag = 'output window, operand 0, single buffered']
    #allocation9 [shape = 'u8[20480]{0}', space=vmem, size = 0x5000, scoped, tag = 'output window, operand 1, single buffered']
    #allocation10 [shape = 's32[1]{0}', space=sflag, size = 0x4, scoped, tag = 'scoped memory for tpu_custom_call.1']
    %12 = vsyncpa [#allocation3], 0
    %13 = vsyncpa [#allocation6], 0
    %14 = vsyncpa [#allocation4], 0
    %15 = vsyncpa [#allocation10], 0
    // Predicated region
    $region2: #{tpu_custom_call.1} parent=1 // pred_check
      _
    $region3: #{tpu_custom_call.1} parent=1 // pred_check_branch
      %17 = sbr.rel (0) target = $region5
    $region4: #{tpu_custom_call.1} parent=1 // pred_region
      %s19 = ssub.s32 64, 64
      %20 = vsyncadd [#allocation3], %s19
      %s22 = sshll.u32 [#allocation2], 4
      %s23 = int_to_ptr.vmem [resolvable:$true] %s22
      %25 = dma.hbm_to_vmem [thread:$0]  %s0, 64, %s23, [#allocation3]
    $region5: #{tpu_custom_call.1} parent=1 // pred_fallthru
      _
    // Predicated region
    $region6: #{tpu_custom_call.1} parent=1 // pred_check
      _
    $region7: #{tpu_custom_call.1} parent=1 // pred_check_branch
      %27 = sbr.rel (0) target = $region9
    $region8: #{tpu_custom_call.1} parent=1 // pred_region
      %s29 = ssub.s32 3072, 3072
      %30 = vsyncadd [#allocation6], %s29
      %s31 = sshll.u32 [#allocation5], 4
      %s32 = int_to_ptr.vmem [resolvable:$true] %s31
      %37 = dma.hbm_to_vmem [thread:$0]  %s1, 3072, %s32, [#allocation6], 64, 64, 4
    $region9: #{tpu_custom_call.1} parent=1 // pred_fallthru
      _
    // Predicated region
    $region10: #{tpu_custom_call.1} parent=1 // pred_check
      _
    $region11: #{tpu_custom_call.1} parent=1 // pred_check_branch
      %39 = sbr.rel (0) target = $region13
    $region12: #{tpu_custom_call.1} parent=1 // pred_region
      _
    $region13: #{tpu_custom_call.1} parent=1 // pred_fallthru
      _
    // Predicated region
    $region14: #{tpu_custom_call.1} parent=1 // pred_check
      _
    $region15: #{tpu_custom_call.1} parent=1 // pred_check_branch
      %41 = sbr.rel (0) target = $region17
    $region16: #{tpu_custom_call.1} parent=1 // pred_region
      %s43 = ssub.s32 5120, 5120
      %44 = vsyncadd [#allocation6], %s43
      %s45 = sshll.u32 [#allocation7], 4
      %s46 = int_to_ptr.vmem [resolvable:$true] %s45
      %51 = dma.hbm_to_vmem [thread:$0]  %s3, 5120, %s46, [#allocation6], 320, 320, 20
    $region17: #{tpu_custom_call.1} parent=1 // pred_fallthru
      _
    // Predicated region
    $region18: #{tpu_custom_call.1} parent=1 // pred_check
      _
    $region19: #{tpu_custom_call.1} parent=1 // pred_check_branch
      %53 = sbr.rel (0) target = $region21
    $region20: #{tpu_custom_call.1} parent=1 // pred_region
      _
    $region21: #{tpu_custom_call.1} parent=1 // pred_fallthru
      _
    // Predicated region
    $region22: #{tpu_custom_call.1} parent=1 // pred_check
      _
    $region23: #{tpu_custom_call.1} parent=1 // pred_check_branch
      %55 = sbr.rel (0) target = $region25
    $region24: #{tpu_custom_call.1} parent=1 // pred_region
      %56 = dma.done [#allocation3], 64
    $region25: #{tpu_custom_call.1} parent=1 // pred_fallthru
      _
    // Predicated region
    $region26: #{tpu_custom_call.1} parent=1 // pred_check
      _
    $region27: #{tpu_custom_call.1} parent=1 // pred_check_branch
      %58 = sbr.rel (0) target = $region29
    $region28: #{tpu_custom_call.1} parent=1 // pred_region
      %59 = dma.done [#allocation6], 3072
    $region29: #{tpu_custom_call.1} parent=1 // pred_fallthru
      _
    // Predicated region
    $region30: #{tpu_custom_call.1} parent=1 // pred_check
      _
    $region31: #{tpu_custom_call.1} parent=1 // pred_check_branch
      %61 = sbr.rel (0) target = $region33
    $region32: #{tpu_custom_call.1} parent=1 // pred_region
      %62 = dma.done [#allocation6], 5120
    $region33: #{tpu_custom_call.1} parent=1 // pred_fallthru
      _
    %v64 = vld [vmem:[#allocation5] sm:$0xf]
    %v65 = vld [vmem:[#allocation5 + $0x4] sm:$0xf]
    %v66 = vld [vmem:[#allocation5 + $0x8] sm:$0xf]
    %v67 = vld [vmem:[#allocation5 + $0xc] sm:$0xf]
    %v68 = vld [vmem:[#allocation5 + $0x10] sm:$0xf]
    %v69 = vld [vmem:[#allocation5 + $0x14] sm:$0xf]
    %v70 = vld [vmem:[#allocation5 + $0x18] sm:$0xf]
    %v71 = vld [vmem:[#allocation5 + $0x1c] sm:$0xf]
    %v72 = vld [vmem:[#allocation5 + $0x20] sm:$0xf]
    %v73 = vld [vmem:[#allocation5 + $0x24] sm:$0xf]
    %v74 = vld [vmem:[#allocation5 + $0x28] sm:$0xf]
    %v75 = vld [vmem:[#allocation5 + $0x2c] sm:$0xf]
    %v76 = vld [vmem:[#allocation5 + $0x30] sm:$0xf]
    %v77 = vld [vmem:[#allocation5 + $0x34] sm:$0xf]
    %v78 = vld [vmem:[#allocation5 + $0x38] sm:$0xf]
    %v79 = vld [vmem:[#allocation5 + $0x3c] sm:$0xf]
    %v80 = vld [vmem:[#allocation2] sm:$0xf]
    %v81 = vld [vmem:[%s2] sm:$0x1]
    %v82 = vlaneseq
    %v83 = vshrl.u32 %v82, 7
    %v84 = vsub.s32 0, %v83
    %v85 = vrot.slane %v81, %v84
    %v102 = vunpack.c.l.b16 %v64
    %v103 = vunpack.c.l.b16 %v65
    %v104 = vunpack.c.l.b16 %v66
    %v105 = vunpack.c.l.b16 %v67
    %v106 = vunpack.c.l.b16 %v68
    %v107 = vunpack.c.l.b16 %v69
    %v108 = vunpack.c.l.b16 %v70
    %v109 = vunpack.c.l.b16 %v71
    %v110 = vunpack.c.l.b16 %v72
    %v111 = vunpack.c.l.b16 %v73
    %v112 = vunpack.c.l.b16 %v74
    %v113 = vunpack.c.l.b16 %v75
    %v114 = vunpack.c.l.b16 %v76
    %v115 = vunpack.c.l.b16 %v77
    %v116 = vunpack.c.l.b16 %v78
    %v117 = vunpack.c.l.b16 %v79
    %v118 = vpack.c.b16 %v103, %v102
    %v119 = vpack.c.b16 %v105, %v104
    %v120 = vpack.c.b16 %v107, %v106
    %v121 = vpack.c.b16 %v109, %v108
    %v122 = vpack.c.b16 %v111, %v110
    %v123 = vpack.c.b16 %v113, %v112
    %v124 = vpack.c.b16 %v115, %v114
    %v125 = vpack.c.b16 %v117, %v116
    %134 = vmatprep.subr.bf16.mxu0 0
    %135 = vmatpush1.bf16.msra.mxu0 %v118
    %136 = vmatprep.subr.bf16.mxu0 0
    %137 = vmatpush1.bf16.msra.mxu0 %v119
    %138 = vmatprep.subr.bf16.mxu0 0
    %139 = vmatpush1.bf16.msra.mxu0 %v120
    %140 = vmatprep.subr.bf16.mxu0 0
    %141 = vmatpush1.bf16.msra.mxu0 %v121
    %142 = vmatprep.subr.bf16.mxu0 0
    %143 = vmatpush1.bf16.msra.mxu0 %v122
    %144 = vmatprep.subr.bf16.mxu0 0
    %145 = vmatpush1.bf16.msra.mxu0 %v123
    %146 = vmatprep.subr.bf16.mxu0 0
    %147 = vmatpush1.bf16.msra.mxu0 %v124
    %148 = vmatprep.subr.bf16.mxu0 0
    %149 = vmatpush1.bf16.msra.mxu0 %v125
    %150 = vmatprep.subr.bf16.mxu0 0
    %151 = vmatpush1.bf16.msra.mxu0 0
    %152 = vmatprep.subr.bf16.mxu0 0
    %153 = vmatpush1.bf16.msra.mxu0 0
    %154 = vmatprep.subr.bf16.mxu0 0
    %155 = vmatpush1.bf16.msra.mxu0 0
    %156 = vmatprep.subr.bf16.mxu0 0
    %157 = vmatpush1.bf16.msra.mxu0 0
    %158 = vmatprep.subr.bf16.mxu0 0
    %159 = vmatpush1.bf16.msra.mxu0 0
    %160 = vmatprep.subr.bf16.mxu0 0
    %161 = vmatpush1.bf16.msra.mxu0 0
    %162 = vmatprep.subr.bf16.mxu0 0
    %163 = vmatpush1.bf16.msra.mxu0 0
    %164 = vmatprep.subr.bf16.mxu0 0
    %165 = vmatpush1.bf16.msra.mxu0 0
    %166 = vmatprep.mubr.bf16.mxu0 0
    %167 = vmatmul.mubr.bf16.gmra.mrb[0].mxu0 %v80
    %v168 = vpop.f32.mrb[0].mxu0
    %v169 = vadd.f32 %v85, %v168
    %v170 = vpop.f32.mrb[0].mxu0
    %v171 = vpop.f32.mrb[0].mxu0
    %v172 = vpop.f32.mrb[0].mxu0
    %173 = vdwg.mxu0
    %v174 = vmax.f32 %v169, 0.0
    %v175 = vld [vmem:[#allocation5 + $0x40] sm:$0xf]
    %v176 = vld [vmem:[#allocation5 + $0x44] sm:$0xf]
    %v177 = vld [vmem:[#allocation5 + $0x48] sm:$0xf]
    %v178 = vld [vmem:[#allocation5 + $0x4c] sm:$0xf]
    %v179 = vld [vmem:[#allocation5 + $0x50] sm:$0xf]
    %v180 = vld [vmem:[#allocation5 + $0x54] sm:$0xf]
    %v181 = vld [vmem:[#allocation5 + $0x58] sm:$0xf]
    %v182 = vld [vmem:[#allocation5 + $0x5c] sm:$0xf]
    %v183 = vld [vmem:[#allocation5 + $0x60] sm:$0xf]
    %v184 = vld [vmem:[#allocation5 + $0x64] sm:$0xf]
    %v185 = vld [vmem:[#allocation5 + $0x68] sm:$0xf]
    %v186 = vld [vmem:[#allocation5 + $0x6c] sm:$0xf]
    %v187 = vld [vmem:[#allocation5 + $0x70] sm:$0xf]
    %v188 = vld [vmem:[#allocation5 + $0x74] sm:$0xf]
    %v189 = vld [vmem:[#allocation5 + $0x78] sm:$0xf]
    %v190 = vld [vmem:[#allocation5 + $0x7c] sm:$0xf]
    %v191 = vpack.c.bf16 %v174, %v174
    %v192 = vld [vmem:[%s2 + $0x1] sm:$0x1]
    %v193 = vlaneseq
    %v194 = vshrl.u32 %v193, 7
    %v195 = vsub.s32 0, %v194
    %v196 = vrot.slane %v192, %v195
    %v213 = vunpack.c.l.b16 %v175
    %v214 = vunpack.c.l.b16 %v176
    %v215 = vunpack.c.l.b16 %v177
    %v216 = vunpack.c.l.b16 %v178
    %v217 = vunpack.c.l.b16 %v179
    %v218 = vunpack.c.l.b16 %v180
    %v219 = vunpack.c.l.b16 %v181
    %v220 = vunpack.c.l.b16 %v182
    %v221 = vunpack.c.l.b16 %v183
    %v222 = vunpack.c.l.b16 %v184
    %v223 = vunpack.c.l.b16 %v185
    %v224 = vunpack.c.l.b16 %v186
    %v225 = vunpack.c.l.b16 %v187
    %v226 = vunpack.c.l.b16 %v188
    %v227 = vunpack.c.l.b16 %v189
    %v228 = vunpack.c.l.b16 %v190
    %v229 = vpack.c.b16 %v214, %v213
    %v230 = vpack.c.b16 %v216, %v215
    %v231 = vpack.c.b16 %v218, %v217
    %v232 = vpack.c.b16 %v220, %v219
    %v233 = vpack.c.b16 %v222, %v221
    %v234 = vpack.c.b16 %v224, %v223
    %v235 = vpack.c.b16 %v226, %v225
    %v236 = vpack.c.b16 %v228, %v227
    %245 = vmatprep.subr.bf16.mxu0 0
    %246 = vmatpush1.bf16.msra.mxu0 %v229
    %247 = vmatprep.subr.bf16.mxu0 0
    %248 = vmatpush1.bf16.msra.mxu0 %v230
    %249 = vmatprep.subr.bf16.mxu0 0
    %250 = vmatpush1.bf16.msra.mxu0 %v231
    %251 = vmatprep.subr.bf16.mxu0 0
    %252 = vmatpush1.bf16.msra.mxu0 %v232
    %253 = vmatprep.subr.bf16.mxu0 0
    %254 = vmatpush1.bf16.msra.mxu0 %v233
    %255 = vmatprep.subr.bf16.mxu0 0
    %256 = vmatpush1.bf16.msra.mxu0 %v234
    %257 = vmatprep.subr.bf16.mxu0 0
    %258 = vmatpush1.bf16.msra.mxu0 %v235
    %259 = vmatprep.subr.bf16.mxu0 0
    %260 = vmatpush1.bf16.msra.mxu0 %v236
    %261 = vmatprep.subr.bf16.mxu0 0
    %262 = vmatpush1.bf16.msra.mxu0 0
    %263 = vmatprep.subr.bf16.mxu0 0
    %264 = vmatpush1.bf16.msra.mxu0 0
    %265 = vmatprep.subr.bf16.mxu0 0
    %266 = vmatpush1.bf16.msra.mxu0 0
    %267 = vmatprep.subr.bf16.mxu0 0
    %268 = vmatpush1.bf16.msra.mxu0 0
    %269 = vmatprep.subr.bf16.mxu0 0
    %270 = vmatpush1.bf16.msra.mxu0 0
    %271 = vmatprep.subr.bf16.mxu0 0
    %272 = vmatpush1.bf16.msra.mxu0 0
    %273 = vmatprep.subr.bf16.mxu0 0
    %274 = vmatpush1.bf16.msra.mxu0 0
    %275 = vmatprep.subr.bf16.mxu0 0
    %276 = vmatpush1.bf16.msra.mxu0 0
    %277 = vmatprep.mubr.bf16.mxu0 0
    %278 = vmatmul.mubr.bf16.gmra.mrb[0].mxu0 %v191
    %v279 = vpop.f32.mrb[0].mxu0
    %v280 = vadd.f32 %v196, %v279
    %v281 = vpop.f32.mrb[0].mxu0
    %v282 = vpop.f32.mrb[0].mxu0
    %v283 = vpop.f32.mrb[0].mxu0
    %284 = vdwg.mxu0
    %v285 = vmax.f32 %v280, 0.0
    %286 = vst [vmem:[#allocation8] sm:$0xff] %v285
    %v287 = vld [vmem:[#allocation5 + $0x80] sm:$0xf]
    %v288 = vld [vmem:[#allocation5 + $0x84] sm:$0xf]
    %v289 = vld [vmem:[#allocation5 + $0x88] sm:$0xf]
    %v290 = vld [vmem:[#allocation5 + $0x8c] sm:$0xf]
    %v291 = vld [vmem:[#allocation5 + $0x90] sm:$0xf]
    %v292 = vld [vmem:[#allocation5 + $0x94] sm:$0xf]
    %v293 = vld [vmem:[#allocation5 + $0x98] sm:$0xf]
    %v294 = vld [vmem:[#allocation5 + $0x9c] sm:$0xf]
    %v295 = vld [vmem:[#allocation5 + $0xa0] sm:$0xf]
    %v296 = vld [vmem:[#allocation5 + $0xa4] sm:$0xf]
    %v297 = vld [vmem:[#allocation5 + $0xa8] sm:$0xf]
    %v298 = vld [vmem:[#allocation5 + $0xac] sm:$0xf]
    %v299 = vld [vmem:[#allocation5 + $0xb0] sm:$0xf]
    %v300 = vld [vmem:[#allocation5 + $0xb4] sm:$0xf]
    %v301 = vld [vmem:[#allocation5 + $0xb8] sm:$0xf]
    %v302 = vld [vmem:[#allocation5 + $0xbc] sm:$0xf]
    %v303 = vpack.c.bf16 %v285, %v285
    %v304 = vld [vmem:[%s2 + $0x2] sm:$0x1]
    %v305 = vlaneseq
    %v306 = vshrl.u32 %v305, 7
    %v307 = vsub.s32 0, %v306
    %v308 = vrot.slane %v304, %v307
    %v325 = vunpack.c.l.b16 %v287
    %v326 = vunpack.c.l.b16 %v288
    %v327 = vunpack.c.l.b16 %v289
    %v328 = vunpack.c.l.b16 %v290
    %v329 = vunpack.c.l.b16 %v291
    %v330 = vunpack.c.l.b16 %v292
    %v331 = vunpack.c.l.b16 %v293
    %v332 = vunpack.c.l.b16 %v294
    %v333 = vunpack.c.l.b16 %v295
    %v334 = vunpack.c.l.b16 %v296
    %v335 = vunpack.c.l.b16 %v297
    %v336 = vunpack.c.l.b16 %v298
    %v337 = vunpack.c.l.b16 %v299
    %v338 = vunpack.c.l.b16 %v300
    %v339 = vunpack.c.l.b16 %v301
    %v340 = vunpack.c.l.b16 %v302
    %v341 = vpack.c.b16 %v326, %v325
    %v342 = vpack.c.b16 %v328, %v327
    %v343 = vpack.c.b16 %v330, %v329
    %v344 = vpack.c.b16 %v332, %v331
    %v345 = vpack.c.b16 %v334, %v333
    %v346 = vpack.c.b16 %v336, %v335
    %v347 = vpack.c.b16 %v338, %v337
    %v348 = vpack.c.b16 %v340, %v339
    %357 = vmatprep.subr.bf16.mxu0 0
    %358 = vmatpush1.bf16.msra.mxu0 %v341
    %359 = vmatprep.subr.bf16.mxu0 0
    %360 = vmatpush1.bf16.msra.mxu0 %v342
    %361 = vmatprep.subr.bf16.mxu0 0
    %362 = vmatpush1.bf16.msra.mxu0 %v343
    %363 = vmatprep.subr.bf16.mxu0 0
    %364 = vmatpush1.bf16.msra.mxu0 %v344
    %365 = vmatprep.subr.bf16.mxu0 0
    %366 = vmatpush1.bf16.msra.mxu0 %v345
    %367 = vmatprep.subr.bf16.mxu0 0
    %368 = vmatpush1.bf16.msra.mxu0 %v346
    %369 = vmatprep.subr.bf16.mxu0 0
    %370 = vmatpush1.bf16.msra.mxu0 %v347
    %371 = vmatprep.subr.bf16.mxu0 0
    %372 = vmatpush1.bf16.msra.mxu0 %v348
    %373 = vmatprep.subr.bf16.mxu0 0
    %374 = vmatpush1.bf16.msra.mxu0 0
    %375 = vmatprep.subr.bf16.mxu0 0
    %376 = vmatpush1.bf16.msra.mxu0 0
    %377 = vmatprep.subr.bf16.mxu0 0
    %378 = vmatpush1.bf16.msra.mxu0 0
    %379 = vmatprep.subr.bf16.mxu0 0
    %380 = vmatpush1.bf16.msra.mxu0 0
    %381 = vmatprep.subr.bf16.mxu0 0
    %382 = vmatpush1.bf16.msra.mxu0 0
    %383 = vmatprep.subr.bf16.mxu0 0
    %384 = vmatpush1.bf16.msra.mxu0 0
    %385 = vmatprep.subr.bf16.mxu0 0
    %386 = vmatpush1.bf16.msra.mxu0 0
    %387 = vmatprep.subr.bf16.mxu0 0
    %388 = vmatpush1.bf16.msra.mxu0 0
    %389 = vmatprep.mubr.bf16.mxu0 0
    %390 = vmatmul.mubr.bf16.gmra.mrb[0].mxu0 %v303
    %v391 = vpop.f32.mrb[0].mxu0
    %v392 = vadd.f32 %v308, %v391
    %v393 = vpop.f32.mrb[0].mxu0
    %v394 = vpop.f32.mrb[0].mxu0
    %v395 = vpop.f32.mrb[0].mxu0
    %396 = vdwg.mxu0
    %v397 = vmax.f32 %v392, 0.0
    %v398 = vpack.c.bf16 %v397, %v397
    %v399 = vld [vmem:[#allocation7] sm:$0xff]
    %v400 = vld [vmem:[#allocation7 + $0x8] sm:$0xff]
    %v401 = vld [vmem:[#allocation7 + $0x10] sm:$0xf]
    %v402 = vld [vmem:[#allocation7 + $0x14] sm:$0xff]
    %v403 = vld [vmem:[#allocation7 + $0x1c] sm:$0xff]
    %v404 = vld [vmem:[#allocation7 + $0x24] sm:$0xf]
    %v405 = vld [vmem:[#allocation7 + $0x28] sm:$0xff]
    %v406 = vld [vmem:[#allocation7 + $0x30] sm:$0xff]
    %v407 = vld [vmem:[#allocation7 + $0x38] sm:$0xf]
    %v408 = vld [vmem:[#allocation7 + $0x3c] sm:$0xff]
    %v409 = vld [vmem:[#allocation7 + $0x44] sm:$0xff]
    %v410 = vld [vmem:[#allocation7 + $0x4c] sm:$0xf]
    %v411 = vld [vmem:[#allocation7 + $0x50] sm:$0xff]
    %v412 = vld [vmem:[#allocation7 + $0x58] sm:$0xff]
    %v413 = vld [vmem:[#allocation7 + $0x60] sm:$0xf]
    %v414 = vld [vmem:[#allocation7 + $0x64] sm:$0xff]
    %v415 = vld [vmem:[#allocation7 + $0x6c] sm:$0xff]
    %v416 = vld [vmem:[#allocation7 + $0x74] sm:$0xf]
    %v417 = vld [vmem:[#allocation7 + $0x78] sm:$0xff]
    %v418 = vld [vmem:[#allocation7 + $0x80] sm:$0xff]
    %v419 = vld [vmem:[#allocation7 + $0x88] sm:$0xf]
    %v420 = vld [vmem:[#allocation7 + $0x8c] sm:$0xff]
    %v421 = vld [vmem:[#allocation7 + $0x94] sm:$0xff]
    %v422 = vld [vmem:[#allocation7 + $0x9c] sm:$0xf]
    %v423 = vld [vmem:[#allocation7 + $0xa0] sm:$0xff]
    %v424 = vld [vmem:[#allocation7 + $0xa8] sm:$0xff]
    %v425 = vld [vmem:[#allocation7 + $0xb0] sm:$0xf]
    %v426 = vld [vmem:[#allocation7 + $0xb4] sm:$0xff]
    %v427 = vld [vmem:[#allocation7 + $0xbc] sm:$0xff]
    %v428 = vld [vmem:[#allocation7 + $0xc4] sm:$0xf]
    %v429 = vld [vmem:[#allocation7 + $0xc8] sm:$0xff]
    %v430 = vld [vmem:[#allocation7 + $0xd0] sm:$0xff]
    %v431 = vld [vmem:[#allocation7 + $0xd8] sm:$0xf]
    %v432 = vld [vmem:[#allocation7 + $0xdc] sm:$0xff]
    %v433 = vld [vmem:[#allocation7 + $0xe4] sm:$0xff]
    %v434 = vld [vmem:[#allocation7 + $0xec] sm:$0xf]
    %v435 = vld [vmem:[#allocation7 + $0xf0] sm:$0xff]
    %v436 = vld [vmem:[#allocation7 + $0xf8] sm:$0xff]
    %v437 = vld [vmem:[#allocation7 + $0x100] sm:$0xf]
    %v438 = vld [vmem:[#allocation7 + $0x104] sm:$0xff]
    %v439 = vld [vmem:[#allocation7 + $0x10c] sm:$0xff]
    %v440 = vld [vmem:[#allocation7 + $0x114] sm:$0xf]
    %v441 = vld [vmem:[#allocation7 + $0x118] sm:$0xff]
    %v442 = vld [vmem:[#allocation7 + $0x120] sm:$0xff]
    %v443 = vld [vmem:[#allocation7 + $0x128] sm:$0xf]
    %v444 = vld [vmem:[#allocation7 + $0x12c] sm:$0xff]
    %v445 = vld [vmem:[#allocation7 + $0x134] sm:$0xff]
    %v446 = vld [vmem:[#allocation7 + $0x13c] sm:$0xf]
    %v447 = vld [vmem:[%s4] sm:$0x1f]
    %v449 = vlaneseq
    %v450 = vshrl.u32 %v449, 7
    %v451 = vsub.s32 0, %v450
    %v452 = vrot.slane %v447, %v451
    %v453 = vlaneseq
    %v454 = vshrl.u32 %v453, 7
    %v455 = vsub.s32 1, %v454
    %v456 = vrot.slane %v447, %v455
    %v457 = vlaneseq
    %v458 = vshrl.u32 %v457, 7
    %v459 = vsub.s32 2, %v458
    %v460 = vrot.slane %v447, %v459
    %v461 = vlaneseq
    %v462 = vshrl.u32 %v461, 7
    %v463 = vsub.s32 3, %v462
    %v464 = vrot.slane %v447, %v463
    %v465 = vlaneseq
    %v466 = vshrl.u32 %v465, 7
    %v467 = vsub.s32 4, %v466
    %v468 = vrot.slane %v447, %v467
    %v522 = vunpack.c.l.b16 %v399
    %v523 = vunpack.c.h.b16 %v399
    %v524 = vunpack.c.l.b16 %v400
    %v525 = vunpack.c.h.b16 %v400
    %v526 = vunpack.c.l.b16 %v401
    %v527 = vunpack.c.l.b16 %v402
    %v528 = vunpack.c.h.b16 %v402
    %v529 = vunpack.c.l.b16 %v403
    %v530 = vunpack.c.h.b16 %v403
    %v531 = vunpack.c.l.b16 %v404
    %v532 = vunpack.c.l.b16 %v405
    %v533 = vunpack.c.h.b16 %v405
    %v534 = vunpack.c.l.b16 %v406
    %v535 = vunpack.c.h.b16 %v406
    %v536 = vunpack.c.l.b16 %v407
    %v537 = vunpack.c.l.b16 %v408
    %v538 = vunpack.c.h.b16 %v408
    %v539 = vunpack.c.l.b16 %v409
    %v540 = vunpack.c.h.b16 %v409
    %v541 = vunpack.c.l.b16 %v410
    %v542 = vunpack.c.l.b16 %v411
    %v543 = vunpack.c.h.b16 %v411
    %v544 = vunpack.c.l.b16 %v412
    %v545 = vunpack.c.h.b16 %v412
    %v546 = vunpack.c.l.b16 %v413
    %v547 = vunpack.c.l.b16 %v414
    %v548 = vunpack.c.h.b16 %v414
    %v549 = vunpack.c.l.b16 %v415
    %v550 = vunpack.c.h.b16 %v415
    %v551 = vunpack.c.l.b16 %v416
    %v552 = vunpack.c.l.b16 %v417
    %v553 = vunpack.c.h.b16 %v417
    %v554 = vunpack.c.l.b16 %v418
    %v555 = vunpack.c.h.b16 %v418
    %v556 = vunpack.c.l.b16 %v419
    %v557 = vunpack.c.l.b16 %v420
    %v558 = vunpack.c.h.b16 %v420
    %v559 = vunpack.c.l.b16 %v421
    %v560 = vunpack.c.h.b16 %v421
    %v561 = vunpack.c.l.b16 %v422
    %v562 = vunpack.c.l.b16 %v423
    %v563 = vunpack.c.h.b16 %v423
    %v564 = vunpack.c.l.b16 %v424
    %v565 = vunpack.c.h.b16 %v424
    %v566 = vunpack.c.l.b16 %v425
    %v567 = vunpack.c.l.b16 %v426
    %v568 = vunpack.c.h.b16 %v426
    %v569 = vunpack.c.l.b16 %v427
    %v570 = vunpack.c.h.b16 %v427
    %v571 = vunpack.c.l.b16 %v428
    %v572 = vunpack.c.l.b16 %v429
    %v573 = vunpack.c.h.b16 %v429
    %v574 = vunpack.c.l.b16 %v430
    %v575 = vunpack.c.h.b16 %v430
    %v576 = vunpack.c.l.b16 %v431
    %v577 = vunpack.c.l.b16 %v432
    %v578 = vunpack.c.h.b16 %v432
    %v579 = vunpack.c.l.b16 %v433
    %v580 = vunpack.c.h.b16 %v433
    %v581 = vunpack.c.l.b16 %v434
    %v582 = vunpack.c.l.b16 %v435
    %v583 = vunpack.c.h.b16 %v435
    %v584 = vunpack.c.l.b16 %v436
    %v585 = vunpack.c.h.b16 %v436
    %v586 = vunpack.c.l.b16 %v437
    %v587 = vunpack.c.l.b16 %v438
    %v588 = vunpack.c.h.b16 %v438
    %v589 = vunpack.c.l.b16 %v439
    %v590 = vunpack.c.h.b16 %v439
    %v591 = vunpack.c.l.b16 %v440
    %v592 = vunpack.c.l.b16 %v441
    %v593 = vunpack.c.h.b16 %v441
    %v594 = vunpack.c.l.b16 %v442
    %v595 = vunpack.c.h.b16 %v442
    %v596 = vunpack.c.l.b16 %v443
    %v597 = vunpack.c.l.b16 %v444
    %v598 = vunpack.c.h.b16 %v444
    %v599 = vunpack.c.l.b16 %v445
    %v600 = vunpack.c.h.b16 %v445
    %v601 = vunpack.c.l.b16 %v446
    %v602 = vpack.c.b16 %v527, %v522
    %v603 = vpack.c.b16 %v528, %v523
    %v604 = vpack.c.b16 %v529, %v524
    %v605 = vpack.c.b16 %v530, %v525
    %v606 = vpack.c.b16 %v531, %v526
    %v607 = vpack.c.b16 %v537, %v532
    %v608 = vpack.c.b16 %v538, %v533
    %v609 = vpack.c.b16 %v539, %v534
    %v610 = vpack.c.b16 %v540, %v535
    %v611 = vpack.c.b16 %v541, %v536
    %v612 = vpack.c.b16 %v547, %v542
    %v613 = vpack.c.b16 %v548, %v543
    %v614 = vpack.c.b16 %v549, %v544
    %v615 = vpack.c.b16 %v550, %v545
    %v616 = vpack.c.b16 %v551, %v546
    %v617 = vpack.c.b16 %v557, %v552
    %v618 = vpack.c.b16 %v558, %v553
    %v619 = vpack.c.b16 %v559, %v554
    %v620 = vpack.c.b16 %v560, %v555
    %v621 = vpack.c.b16 %v561, %v556
    %v622 = vpack.c.b16 %v567, %v562
    %v623 = vpack.c.b16 %v568, %v563
    %v624 = vpack.c.b16 %v569, %v564
    %v625 = vpack.c.b16 %v570, %v565
    %v626 = vpack.c.b16 %v571, %v566
    %v627 = vpack.c.b16 %v577, %v572
    %v628 = vpack.c.b16 %v578, %v573
    %v629 = vpack.c.b16 %v579, %v574
    %v630 = vpack.c.b16 %v580, %v575
    %v631 = vpack.c.b16 %v581, %v576
    %v632 = vpack.c.b16 %v587, %v582
    %v633 = vpack.c.b16 %v588, %v583
    %v634 = vpack.c.b16 %v589, %v584
    %v635 = vpack.c.b16 %v590, %v585
    %v636 = vpack.c.b16 %v591, %v586
    %v637 = vpack.c.b16 %v597, %v592
    %v638 = vpack.c.b16 %v598, %v593
    %v639 = vpack.c.b16 %v599, %v594
    %v640 = vpack.c.b16 %v600, %v595
    %v641 = vpack.c.b16 %v601, %v596
    %682 = vmatprep.subr.bf16.mxu0 %v603
    %683 = vmatpush1.bf16.msra.mxu0 %v602
    %684 = vmatprep.subr.bf16.mxu0 %v608
    %685 = vmatpush1.bf16.msra.mxu0 %v607
    %686 = vmatprep.subr.bf16.mxu0 %v613
    %687 = vmatpush1.bf16.msra.mxu0 %v612
    %688 = vmatprep.subr.bf16.mxu0 %v618
    %689 = vmatpush1.bf16.msra.mxu0 %v617
    %690 = vmatprep.subr.bf16.mxu0 %v623
    %691 = vmatpush1.bf16.msra.mxu0 %v622
    %692 = vmatprep.subr.bf16.mxu0 %v628
    %693 = vmatpush1.bf16.msra.mxu0 %v627
    %694 = vmatprep.subr.bf16.mxu0 %v633
    %695 = vmatpush1.bf16.msra.mxu0 %v632
    %696 = vmatprep.subr.bf16.mxu0 %v638
    %697 = vmatpush1.bf16.msra.mxu0 %v637
    %698 = vmatprep.subr.bf16.mxu0 0
    %699 = vmatpush1.bf16.msra.mxu0 0
    %700 = vmatprep.subr.bf16.mxu0 0
    %701 = vmatpush1.bf16.msra.mxu0 0
    %702 = vmatprep.subr.bf16.mxu0 0
    %703 = vmatpush1.bf16.msra.mxu0 0
    %704 = vmatprep.subr.bf16.mxu0 0
    %705 = vmatpush1.bf16.msra.mxu0 0
    %706 = vmatprep.subr.bf16.mxu0 0
    %707 = vmatpush1.bf16.msra.mxu0 0
    %708 = vmatprep.subr.bf16.mxu0 0
    %709 = vmatpush1.bf16.msra.mxu0 0
    %710 = vmatprep.subr.bf16.mxu0 0
    %711 = vmatpush1.bf16.msra.mxu0 0
    %712 = vmatprep.subr.bf16.mxu0 0
    %713 = vmatpush1.bf16.msra.mxu0 0
    %714 = vmatprep.mubr.bf16.mxu0 0
    %715 = vmatmul.mubr.bf16.gmra.mrb[0].mxu0 %v398
    %v716 = vpop.f32.mrb[0].mxu0
    %v717 = vadd.f32 %v452, %v716
    %v718 = vpop.f32.mrb[0].mxu0
    %v719 = vadd.f32 %v456, %v718
    %v720 = vpop.f32.mrb[0].mxu0
    %v721 = vpop.f32.mrb[0].mxu0
    %722 = vdwg.mxu0
    %723 = vmatprep.subr.bf16.mxu0 %v605
    %724 = vmatpush1.bf16.msra.mxu0 %v604
    %725 = vmatprep.subr.bf16.mxu0 %v610
    %726 = vmatpush1.bf16.msra.mxu0 %v609
    %727 = vmatprep.subr.bf16.mxu0 %v615
    %728 = vmatpush1.bf16.msra.mxu0 %v614
    %729 = vmatprep.subr.bf16.mxu0 %v620
    %730 = vmatpush1.bf16.msra.mxu0 %v619
    %731 = vmatprep.subr.bf16.mxu0 %v625
    %732 = vmatpush1.bf16.msra.mxu0 %v624
    %733 = vmatprep.subr.bf16.mxu0 %v630
    %734 = vmatpush1.bf16.msra.mxu0 %v629
    %735 = vmatprep.subr.bf16.mxu0 %v635
    %736 = vmatpush1.bf16.msra.mxu0 %v634
    %737 = vmatprep.subr.bf16.mxu0 %v640
    %738 = vmatpush1.bf16.msra.mxu0 %v639
    %739 = vmatprep.subr.bf16.mxu0 0
    %740 = vmatpush1.bf16.msra.mxu0 0
    %741 = vmatprep.subr.bf16.mxu0 0
    %742 = vmatpush1.bf16.msra.mxu0 0
    %743 = vmatprep.subr.bf16.mxu0 0
    %744 = vmatpush1.bf16.msra.mxu0 0
    %745 = vmatprep.subr.bf16.mxu0 0
    %746 = vmatpush1.bf16.msra.mxu0 0
    %747 = vmatprep.subr.bf16.mxu0 0
    %748 = vmatpush1.bf16.msra.mxu0 0
    %749 = vmatprep.subr.bf16.mxu0 0
    %750 = vmatpush1.bf16.msra.mxu0 0
    %751 = vmatprep.subr.bf16.mxu0 0
    %752 = vmatpush1.bf16.msra.mxu0 0
    %753 = vmatprep.subr.bf16.mxu0 0
    %754 = vmatpush1.bf16.msra.mxu0 0
    %755 = vmatprep.mubr.bf16.mxu0 0
    %756 = vmatmul.mubr.bf16.gmra.mrb[0].mxu0 %v398
    %v757 = vpop.f32.mrb[0].mxu0
    %v758 = vadd.f32 %v460, %v757
    %v759 = vpop.f32.mrb[0].mxu0
    %v760 = vadd.f32 %v464, %v759
    %v761 = vpop.f32.mrb[0].mxu0
    %v762 = vpop.f32.mrb[0].mxu0
    %763 = vdwg.mxu0
    %764 = vmatprep.subr.bf16.mxu0 0
    %765 = vmatpush1.bf16.msra.mxu0 %v606
    %766 = vmatprep.subr.bf16.mxu0 0
    %767 = vmatpush1.bf16.msra.mxu0 %v611
    %768 = vmatprep.subr.bf16.mxu0 0
    %769 = vmatpush1.bf16.msra.mxu0 %v616
    %770 = vmatprep.subr.bf16.mxu0 0
    %771 = vmatpush1.bf16.msra.mxu0 %v621
    %772 = vmatprep.subr.bf16.mxu0 0
    %773 = vmatpush1.bf16.msra.mxu0 %v626
    %774 = vmatprep.subr.bf16.mxu0 0
    %775 = vmatpush1.bf16.msra.mxu0 %v631
    %776 = vmatprep.subr.bf16.mxu0 0
    %777 = vmatpush1.bf16.msra.mxu0 %v636
    %778 = vmatprep.subr.bf16.mxu0 0
    %779 = vmatpush1.bf16.msra.mxu0 %v641
    %780 = vmatprep.subr.bf16.mxu0 0
    %781 = vmatpush1.bf16.msra.mxu0 0
    %782 = vmatprep.subr.bf16.mxu0 0
    %783 = vmatpush1.bf16.msra.mxu0 0
    %784 = vmatprep.subr.bf16.mxu0 0
    %785 = vmatpush1.bf16.msra.mxu0 0
    %786 = vmatprep.subr.bf16.mxu0 0
    %787 = vmatpush1.bf16.msra.mxu0 0
    %788 = vmatprep.subr.bf16.mxu0 0
    %789 = vmatpush1.bf16.msra.mxu0 0
    %790 = vmatprep.subr.bf16.mxu0 0
    %791 = vmatpush1.bf16.msra.mxu0 0
    %792 = vmatprep.subr.bf16.mxu0 0
    %793 = vmatpush1.bf16.msra.mxu0 0
    %794 = vmatprep.subr.bf16.mxu0 0
    %795 = vmatpush1.bf16.msra.mxu0 0
    %796 = vmatprep.mubr.bf16.mxu0 0
    %797 = vmatmul.mubr.bf16.gmra.mrb[0].mxu0 %v398
    %v798 = vpop.f32.mrb[0].mxu0
    %v799 = vadd.f32 %v468, %v798
    %v800 = vpop.f32.mrb[0].mxu0
    %v801 = vpop.f32.mrb[0].mxu0
    %v802 = vpop.f32.mrb[0].mxu0
    %803 = vdwg.mxu0
    %804 = vst [vmem:[#allocation9] sm:$0xff] %v717
    %805 = vst [vmem:[#allocation9 + $0x8] sm:$0xff] %v719
    %806 = vst [vmem:[#allocation9 + $0x10] sm:$0xff] %v758
    %807 = vst [vmem:[#allocation9 + $0x18] sm:$0xff] %v760
    %808 = vst [vmem:[#allocation9 + $0x20] sm:$0xff] %v799
    // Predicated region
    $region34: #{tpu_custom_call.1} parent=1 // pred_check
      _
    $region35: #{tpu_custom_call.1} parent=1 // pred_check_branch
      %810 = sbr.rel (0) target = $region37
    $region36: #{tpu_custom_call.1} parent=1 // pred_region
      %s812 = ssub.s32 128, 128
      %813 = vsyncadd [#allocation4], %s812
      %s815 = sshll.u32 [#allocation8], 4
      %s816 = int_to_ptr.vmem [resolvable:$true] %s815
      %818 = dma.vmem_to_hbm [thread:$0]  %s816, 128, %s5, [#allocation4]
    $region37: #{tpu_custom_call.1} parent=1 // pred_fallthru
      _
    // Predicated region
    $region38: #{tpu_custom_call.1} parent=1 // pred_check
      _
    $region39: #{tpu_custom_call.1} parent=1 // pred_check_branch
      %820 = sbr.rel (0) target = $region41
    $region40: #{tpu_custom_call.1} parent=1 // pred_region
      %s822 = ssub.s32 640, 640
      %823 = vsyncadd [#allocation10], %s822
      %s825 = sshll.u32 [#allocation9], 4
      %s826 = int_to_ptr.vmem [resolvable:$true] %s825
      %828 = dma.vmem_to_hbm [thread:$0]  %s826, 640, %s6, [#allocation10]
    $region41: #{tpu_custom_call.1} parent=1 // pred_fallthru
      _
    // Predicated region
    $region42: #{tpu_custom_call.1} parent=1 // pred_check
      _
    $region43: #{tpu_custom_call.1} parent=1 // pred_check_branch
      %830 = sbr.rel (0) target = $region45
    $region44: #{tpu_custom_call.1} parent=1 // pred_region
      %831 = dma.done [#allocation4], 128
    $region45: #{tpu_custom_call.1} parent=1 // pred_fallthru
      _
    // Predicated region
    $region46: #{tpu_custom_call.1} parent=1 // pred_check
      _
    $region47: #{tpu_custom_call.1} parent=1 // pred_check_branch
      %833 = sbr.rel (0) target = $region49
    $region48: #{tpu_custom_call.1} parent=1 // pred_region
      %834 = dma.done [#allocation10], 640
    $region49: #{tpu_custom_call.1} parent=1 // pred_fallthru
      _
    %835 = vsyncpa [#allocation3], 1
    %836 = vsyncpa [#allocation6], 1
    %837 = vsyncpa [#allocation4], 1
    %838 = vsyncpa [#allocation10], 1

</llo_original>
